<compile_context>
chip_gen: v7x
topology: tpu7x:2x2x1
jax: 0.10.0
libtpu: 0.0.40
codegen_flags: <defaults>
</compile_context>

<pallas_src>
import jax
import jax.numpy as jnp
from jax.experimental import pallas as pl
from jax.experimental.pallas import tpu as pltpu

SIZE_IN = 13
SIZE_H1 = 25
SIZE_H2 = 12
SIZE_H3 = 6
SIZE_H4 = 1

# Max batch tile (lanes per grid step). 32768 lanes of f32:
#   x input  : 2 buf * 16 sublane * TB * 4 B = 4.0 MiB
#   output   : 2 buf *  8 sublane * TB * 4 B = 2.0 MiB
#   h1/h2/h3 : (32+16+8) sublane * TB * 4 B  = 7.0 MiB
# -> ~13-14 MiB working set, well under the 32 MiB scoped-VMEM limit below and far
# under physical VMEM on v5e/v6e (128 MiB) and v7x (64 MiB per TC).
DEFAULT_TB_MAX = 32768
VMEM_LIMIT_BYTES = 32 * 1024 * 1024


def _round_up(n, m):
    return ((n + m - 1) // m) * m


def boston_mlp_kernel(x_ref,
                      w1_ref, b1_ref,
                      w2_ref, b2_ref,
                      w3_ref, b3_ref,
                      w4_ref, b4_ref,
                      o_ref):
    # x_ref: (13, TB) batch-on-lanes tile. Weights: (out, in). Biases: (out, 1),
    # broadcast across the lane (batch) axis.
    x = x_ref[...]                                                        # (13, TB)

    h1 = jnp.dot(w1_ref[...], x, preferred_element_type=jnp.float32) + b1_ref[...]
    h1 = jnp.maximum(h1, 0.0)                                             # (25, TB)

    h2 = jnp.dot(w2_ref[...], h1, preferred_element_type=jnp.float32) + b2_ref[...]
    h2 = jnp.maximum(h2, 0.0)                                             # (12, TB)

    h3 = jnp.dot(w3_ref[...], h2, preferred_element_type=jnp.float32) + b3_ref[...]
    h3 = jnp.maximum(h3, 0.0)                                             # (6, TB)

    out = jnp.dot(w4_ref[...], h3, preferred_element_type=jnp.float32) + b4_ref[...]
    o_ref[...] = out.astype(o_ref.dtype)                                  # (1, TB) lane-dense


def boston_model_forward(x, params, tb_max=DEFAULT_TB_MAX):
    """x: (B, 13) float32 (PyTorch layout). Returns (B, 1) float32."""
    assert tb_max % 128 == 0, "tb_max must be a multiple of 128 (lane width)"
    B = x.shape[0]
    w1, b1 = params["w1"], params["b1"]
    w2, b2 = params["w2"], params["b2"]
    w3, b3 = params["w3"], params["b3"]
    w4, b4 = params["w4"], params["b4"]

    # Lane tile: multiple of 128, capped at tb_max. For large batches the steps are
    # balanced (cdiv) so multi-step grids stay mostly full and v7x's two TCs both
    # get work via the "parallel" batch axis.
    b128 = _round_up(max(B, 1), 128)
    num_steps = pl.cdiv(b128, tb_max)
    TB = _round_up(pl.cdiv(b128, num_steps), 128)
    B_pad = TB * num_steps

    # Batch-on-lanes layout; zero-padded columns are sliced off at the end.
    x_t = jnp.pad(x.T, ((0, 0), (0, B_pad - B)))                          # (13, B_pad)

    # Parameters: full-array blocks with constant index maps -> DMA'd once,
    # VMEM-resident across all grid steps.
    resident = lambda a: pl.BlockSpec(a.shape, lambda i: (0, 0))

    out_t = pl.pallas_call(
        boston_mlp_kernel,
        out_shape=jax.ShapeDtypeStruct((SIZE_H4, B_pad), jnp.float32),
        grid=(num_steps,),
        in_specs=[
            pl.BlockSpec((SIZE_IN, TB), lambda i: (0, i)),                # streamed x tile
            resident(w1), resident(b1),
            resident(w2), resident(b2),
            resident(w3), resident(b3),
            resident(w4), resident(b4),
        ],
        out_specs=pl.BlockSpec((SIZE_H4, TB), lambda i: (0, i)),          # lane-dense output slab
        compiler_params=pltpu.CompilerParams(
            dimension_semantics=("parallel",),
            vmem_limit_bytes=VMEM_LIMIT_BYTES,
        ),
    )(x_t, w1, b1, w2, b2, w3, b3, w4, b4)

    return out_t.T[:B]                                                    # (B, 1)


def init_params(key):
    """Deterministic init mirroring PyTorch nn.Linear default:
    U(-1/sqrt(fan_in), 1/sqrt(fan_in)). Weights stored (out, in), biases (out, 1)."""
    dims = [(SIZE_IN, SIZE_H1), (SIZE_H1, SIZE_H2), (SIZE_H2, SIZE_H3), (SIZE_H3, SIZE_H4)]
    params = {}
    keys = jax.random.split(key, 2 * len(dims))
    for i, (fan_in, fan_out) in enumerate(dims):
        bound = 1.0 / (fan_in ** 0.5)
        w = jax.random.uniform(keys[2 * i], (fan_out, fan_in),
                               minval=-bound, maxval=bound, dtype=jnp.float32)
        b = jax.random.uniform(keys[2 * i + 1], (fan_out, 1),
                               minval=-bound, maxval=bound, dtype=jnp.float32)
        params[f"w{i + 1}"] = w
        params[f"b{i + 1}"] = b
    return params


def reference_forward(x, params):
    """Pure-JAX reference in PyTorch orientation: y = x @ W.T + b."""
    h = x
    for i in range(1, 4):
        h = jnp.maximum(h @ params[f"w{i}"].T + params[f"b{i}"].T, 0.0)
    return h @ params["w4"].T + params["b4"].T


if __name__ == "__main__":
    key = jax.random.PRNGKey(0)
    k_x, k_p, k_big = jax.random.split(key, 3)

    params = init_params(k_p)

    # Small-batch correctness check (exercises the lane-padding path: 8 -> 128 lanes).
    batch = 8
    x = jax.random.normal(k_x, (batch, SIZE_IN), dtype=jnp.float32)
    out = jax.block_until_ready(boston_model_forward(x, params))
    ref = reference_forward(x, params)
    assert out.shape == (batch, SIZE_H4), out.shape
    assert jnp.allclose(out, ref, atol=1e-5, rtol=1e-5), \
        f"max abs err {jnp.max(jnp.abs(out - ref))}"

    # Non-multiple batch with a small tile cap to exercise the multi-step grid
    # (2 balanced grid steps) while keeping the test shapes small.
    big_batch = 1000
    xb = jax.random.normal(k_big, (big_batch, SIZE_IN), dtype=jnp.float32)
    outb = jax.block_until_ready(boston_model_forward(xb, params, tb_max=512))
    refb = reference_forward(xb, params)
    assert outb.shape == (big_batch, SIZE_H4), outb.shape
    assert jnp.allclose(outb, refb, atol=1e-4, rtol=1e-5), \
        f"max abs err {jnp.max(jnp.abs(outb - refb))}"

    print("KERNEL_OK")
</pallas_src>

<mosaic_0001>
module attributes {stable_mosaic.version = 11 : i64} {
  func.func @boston_mlp_kernel(%arg0: i32, %arg1: memref<13x128xf32, #tpu.memory_space<vmem>>, %arg2: memref<25x13xf32, #tpu.memory_space<vmem>>, %arg3: memref<25x1xf32, #tpu.memory_space<vmem>>, %arg4: memref<12x25xf32, #tpu.memory_space<vmem>>, %arg5: memref<12x1xf32, #tpu.memory_space<vmem>>, %arg6: memref<6x12xf32, #tpu.memory_space<vmem>>, %arg7: memref<6x1xf32, #tpu.memory_space<vmem>>, %arg8: memref<1x6xf32, #tpu.memory_space<vmem>>, %arg9: memref<1x1xf32, #tpu.memory_space<vmem>>, %arg10: memref<1x128xf32, #tpu.memory_space<vmem>>) attributes {dimension_semantics = [#tpu.dimension_semantics<parallel>], iteration_bounds = array<i64: 1>, scalar_prefetch = 0 : i64, scratch_operands = 0 : i64, tpu.core_type = #tpu.core_type<tc>, window_params = [{transform_indices = @transform_0, window_bounds = array<i64: 13, 128>}, {pipeline_mode = #tpu.pipeline_mode<synchronous>, transform_indices = @transform_1, window_bounds = array<i64: 25, 13>}, {pipeline_mode = #tpu.pipeline_mode<synchronous>, transform_indices = @transform_2, window_bounds = array<i64: 25, 1>}, {pipeline_mode = #tpu.pipeline_mode<synchronous>, transform_indices = @transform_3, window_bounds = array<i64: 12, 25>}, {pipeline_mode = #tpu.pipeline_mode<synchronous>, transform_indices = @transform_4, window_bounds = array<i64: 12, 1>}, {pipeline_mode = #tpu.pipeline_mode<synchronous>, transform_indices = @transform_5, window_bounds = array<i64: 6, 12>}, {pipeline_mode = #tpu.pipeline_mode<synchronous>, transform_indices = @transform_6, window_bounds = array<i64: 6, 1>}, {pipeline_mode = #tpu.pipeline_mode<synchronous>, transform_indices = @transform_7, window_bounds = array<i64: 1, 6>}, {pipeline_mode = #tpu.pipeline_mode<synchronous>, transform_indices = @transform_8, window_bounds = array<i64: 1, 1>}, {transform_indices = @transform_9, window_bounds = array<i64: 1, 128>}]} {
    %c0 = arith.constant 0 : index
    %c0_0 = arith.constant 0 : index
    %0 = vector.load %arg1[%c0, %c0_0] : memref<13x128xf32, #tpu.memory_space<vmem>>, vector<13x128xf32>
    %c0_1 = arith.constant 0 : index
    %c0_2 = arith.constant 0 : index
    %1 = vector.load %arg2[%c0_1, %c0_2] : memref<25x13xf32, #tpu.memory_space<vmem>>, vector<25x13xf32>
    %cst = arith.constant dense<0.000000e+00> : vector<25x128xf32>
    %2 = tpu.matmul %1, %0, %cst {dimension_numbers = #tpu.dot_dimension_numbers<[1], [0], [0], [1], [0, 0, 1, 1], [], []>} : vector<25x13xf32>, vector<13x128xf32>, vector<25x128xf32> -> vector<25x128xf32>
    %c0_3 = arith.constant 0 : index
    %c0_4 = arith.constant 0 : index
    %3 = vector.load %arg3[%c0_3, %c0_4] : memref<25x1xf32, #tpu.memory_space<vmem>>, vector<25x1xf32>
    %4 = vector.broadcast %3 : vector<25x1xf32> to vector<25x128xf32>
    %5 = arith.addf %2, %4 : vector<25x128xf32>
    %cst_5 = arith.constant 0.000000e+00 : f32
    %6 = vector.broadcast %cst_5 : f32 to vector<25x128xf32>
    %7 = arith.maximumf %5, %6 : vector<25x128xf32>
    %c0_6 = arith.constant 0 : index
    %c0_7 = arith.constant 0 : index
    %8 = vector.load %arg4[%c0_6, %c0_7] : memref<12x25xf32, #tpu.memory_space<vmem>>, vector<12x25xf32>
    %cst_8 = arith.constant dense<0.000000e+00> : vector<12x128xf32>
    %9 = tpu.matmul %8, %7, %cst_8 {dimension_numbers = #tpu.dot_dimension_numbers<[1], [0], [0], [1], [0, 0, 1, 1], [], []>} : vector<12x25xf32>, vector<25x128xf32>, vector<12x128xf32> -> vector<12x128xf32>
    %c0_9 = arith.constant 0 : index
    %c0_10 = arith.constant 0 : index
    %10 = vector.load %arg5[%c0_9, %c0_10] : memref<12x1xf32, #tpu.memory_space<vmem>>, vector<12x1xf32>
    %11 = vector.broadcast %10 : vector<12x1xf32> to vector<12x128xf32>
    %12 = arith.addf %9, %11 : vector<12x128xf32>
    %cst_11 = arith.constant 0.000000e+00 : f32
    %13 = vector.broadcast %cst_11 : f32 to vector<12x128xf32>
    %14 = arith.maximumf %12, %13 : vector<12x128xf32>
    %c0_12 = arith.constant 0 : index
    %c0_13 = arith.constant 0 : index
    %15 = vector.load %arg6[%c0_12, %c0_13] : memref<6x12xf32, #tpu.memory_space<vmem>>, vector<6x12xf32>
    %cst_14 = arith.constant dense<0.000000e+00> : vector<6x128xf32>
    %16 = tpu.matmul %15, %14, %cst_14 {dimension_numbers = #tpu.dot_dimension_numbers<[1], [0], [0], [1], [0, 0, 1, 1], [], []>} : vector<6x12xf32>, vector<12x128xf32>, vector<6x128xf32> -> vector<6x128xf32>
    %c0_15 = arith.constant 0 : index
    %c0_16 = arith.constant 0 : index
    %17 = vector.load %arg7[%c0_15, %c0_16] : memref<6x1xf32, #tpu.memory_space<vmem>>, vector<6x1xf32>
    %18 = vector.broadcast %17 : vector<6x1xf32> to vector<6x128xf32>
    %19 = arith.addf %16, %18 : vector<6x128xf32>
    %cst_17 = arith.constant 0.000000e+00 : f32
    %20 = vector.broadcast %cst_17 : f32 to vector<6x128xf32>
    %21 = arith.maximumf %19, %20 : vector<6x128xf32>
    %c0_18 = arith.constant 0 : index
    %c0_19 = arith.constant 0 : index
    %22 = vector.load %arg8[%c0_18, %c0_19] : memref<1x6xf32, #tpu.memory_space<vmem>>, vector<1x6xf32>
    %cst_20 = arith.constant dense<0.000000e+00> : vector<1x128xf32>
    %23 = tpu.matmul %22, %21, %cst_20 {dimension_numbers = #tpu.dot_dimension_numbers<[1], [0], [0], [1], [0, 0, 1, 1], [], []>} : vector<1x6xf32>, vector<6x128xf32>, vector<1x128xf32> -> vector<1x128xf32>
    %c0_21 = arith.constant 0 : index
    %c0_22 = arith.constant 0 : index
    %24 = vector.load %arg9[%c0_21, %c0_22] : memref<1x1xf32, #tpu.memory_space<vmem>>, vector<1x1xf32>
    %25 = vector.broadcast %24 : vector<1x1xf32> to vector<1x128xf32>
    %26 = arith.addf %23, %25 : vector<1x128xf32>
    %c0_23 = arith.constant 0 : index
    %c0_24 = arith.constant 0 : index
    %27 = vector.load %arg10[%c0_23, %c0_24] : memref<1x128xf32, #tpu.memory_space<vmem>>, vector<1x128xf32>
    tpu.vector_store %arg10[%c0_23, %c0_24], %26 {strides = array<i32>} : memref<1x128xf32, #tpu.memory_space<vmem>>, vector<1x128xf32>,
    return
  }
  func.func @transform_0(%arg0: i32) -> (i32, i32) {
    %c0_i32 = arith.constant 0 : i32
    %c0_i32_0 = arith.constant 0 : i32
    return %c0_i32, %arg0 : i32, i32
  }
  func.func @transform_1(%arg0: i32) -> (i32, i32) {
    %c0_i32 = arith.constant 0 : i32
    %c0_i32_0 = arith.constant 0 : i32
    %c0_i32_1 = arith.constant 0 : i32
    return %c0_i32, %c0_i32_0 : i32, i32
  }
  func.func @transform_2(%arg0: i32) -> (i32, i32) {
    %c0_i32 = arith.constant 0 : i32
    %c0_i32_0 = arith.constant 0 : i32
    %c0_i32_1 = arith.constant 0 : i32
    return %c0_i32, %c0_i32_0 : i32, i32
  }
  func.func @transform_3(%arg0: i32) -> (i32, i32) {
    %c0_i32 = arith.constant 0 : i32
    %c0_i32_0 = arith.constant 0 : i32
    %c0_i32_1 = arith.constant 0 : i32
    return %c0_i32, %c0_i32_0 : i32, i32
  }
  func.func @transform_4(%arg0: i32) -> (i32, i32) {
    %c0_i32 = arith.constant 0 : i32
    %c0_i32_0 = arith.constant 0 : i32
    %c0_i32_1 = arith.constant 0 : i32
    return %c0_i32, %c0_i32_0 : i32, i32
  }
  func.func @transform_5(%arg0: i32) -> (i32, i32) {
    %c0_i32 = arith.constant 0 : i32
    %c0_i32_0 = arith.constant 0 : i32
    %c0_i32_1 = arith.constant 0 : i32
    return %c0_i32, %c0_i32_0 : i32, i32
  }
  func.func @transform_6(%arg0: i32) -> (i32, i32) {
    %c0_i32 = arith.constant 0 : i32
    %c0_i32_0 = arith.constant 0 : i32
    %c0_i32_1 = arith.constant 0 : i32
    return %c0_i32, %c0_i32_0 : i32, i32
  }
  func.func @transform_7(%arg0: i32) -> (i32, i32) {
    %c0_i32 = arith.constant 0 : i32
    %c0_i32_0 = arith.constant 0 : i32
    %c0_i32_1 = arith.constant 0 : i32
    return %c0_i32, %c0_i32_0 : i32, i32
  }
  func.func @transform_8(%arg0: i32) -> (i32, i32) {
    %c0_i32 = arith.constant 0 : i32
    %c0_i32_0 = arith.constant 0 : i32
    %c0_i32_1 = arith.constant 0 : i32
    return %c0_i32, %c0_i32_0 : i32, i32
  }
  func.func @transform_9(%arg0: i32) -> (i32, i32) {
    %c0_i32 = arith.constant 0 : i32
    %c0_i32_0 = arith.constant 0 : i32
    return %c0_i32, %arg0 : i32, i32
  }
}

</mosaic_0001>

<llo_original>
// kernel: tpu_custom_call.1
$region0: #{tpu_custom_call.1}
  #allocation0 [shape = 'u32[]', space=smem, size = 0x4, offset = 0x4, fixed_abs, tag = 'smem constant byte address 0x4 - core index']
  #allocation1 [shape = 'u32[144,128]{1,0:T(1,128)}', space=vmem, size = 0x12000, scoped, tag = 'internal scratch']
  #allocation2 [shape = 'f32[1,1]{1,0:T(1,128)S(1)}', space=vmem, size = 0x200, scoped, tag = 'scoped memory for tpu_custom_call.1']
  %s0 = inlined_call_operand.vmem [shape: f32[13,128], index: 0, kind: input, shape index: {}]
  %s1 = inlined_call_operand.vmem [shape: f32[25,13], index: 1, kind: input, shape index: {}]
  %s2 = inlined_call_operand.vmem [shape: f32[25,1], index: 2, kind: input, shape index: {}]
  %s3 = inlined_call_operand.vmem [shape: f32[12,25], index: 3, kind: input, shape index: {}]
  %s4 = inlined_call_operand.vmem [shape: f32[12,1], index: 4, kind: input, shape index: {}]
  %s5 = inlined_call_operand.vmem [shape: f32[6,12], index: 5, kind: input, shape index: {}]
  %s6 = inlined_call_operand.vmem [shape: f32[6,1], index: 6, kind: input, shape index: {}]
  %s7 = inlined_call_operand.vmem [shape: f32[1,6], index: 7, kind: input, shape index: {}]
  %s8 = inlined_call_operand.<no memory space> [shape: f32[1,1], index: 8, kind: input, shape index: {}]
  %s9 = inlined_call_operand.hbm [shape: f32[1,128], index: 9, kind: output, shape index: {}]
  %s10 = sld [smem:[#allocation0]]
  $region46: #{tpu_custom_call.1} parent=0
    _
  %s12 = ssub.s32 1, %s10
  %s13 = scalar_select 0, %s12, %s10
  %v14 = vstv %s8
  %15 = vst [vmem:[#allocation2] sm:$0x1] %v14
  $region1: #{tpu_custom_call.1} parent=0
    #allocation3 [shape = 'u8[512]{0}', space=vmem, size = 0x400, scoped, tag = 'output window, operand 0, single buffered']
    #allocation4 [shape = 's32[1]{0}', space=sflag, size = 0x4, scoped, tag = 'scoped memory for tpu_custom_call.1']
    %16 = vsyncpa [#allocation4], 0
    // Predicated region
    $region2: #{tpu_custom_call.1} parent=1 // pred_check
      _
    $region3: #{tpu_custom_call.1} parent=1 // pred_check_branch
      %18 = sbr.rel (0) target = $region5
    $region4: #{tpu_custom_call.1} parent=1 // pred_region
      _
    $region5: #{tpu_custom_call.1} parent=1 // pred_fallthru
      _
    // Predicated region
    $region6: #{tpu_custom_call.1} parent=1 // pred_check
      _
    $region7: #{tpu_custom_call.1} parent=1 // pred_check_branch
      %20 = sbr.rel (0) target = $region9
    $region8: #{tpu_custom_call.1} parent=1 // pred_region
      _
    $region9: #{tpu_custom_call.1} parent=1 // pred_fallthru
      _
    // Predicated region
    $region10: #{tpu_custom_call.1} parent=1 // pred_check
      _
    $region11: #{tpu_custom_call.1} parent=1 // pred_check_branch
      %22 = sbr.rel (0) target = $region13
    $region12: #{tpu_custom_call.1} parent=1 // pred_region
      _
    $region13: #{tpu_custom_call.1} parent=1 // pred_fallthru
      _
    // Predicated region
    $region14: #{tpu_custom_call.1} parent=1 // pred_check
      _
    $region15: #{tpu_custom_call.1} parent=1 // pred_check_branch
      %24 = sbr.rel (0) target = $region17
    $region16: #{tpu_custom_call.1} parent=1 // pred_region
      _
    $region17: #{tpu_custom_call.1} parent=1 // pred_fallthru
      _
    // Predicated region
    $region18: #{tpu_custom_call.1} parent=1 // pred_check
      _
    $region19: #{tpu_custom_call.1} parent=1 // pred_check_branch
      %26 = sbr.rel (0) target = $region21
    $region20: #{tpu_custom_call.1} parent=1 // pred_region
      _
    $region21: #{tpu_custom_call.1} parent=1 // pred_fallthru
      _
    // Predicated region
    $region22: #{tpu_custom_call.1} parent=1 // pred_check
      _
    $region23: #{tpu_custom_call.1} parent=1 // pred_check_branch
      %28 = sbr.rel (0) target = $region25
    $region24: #{tpu_custom_call.1} parent=1 // pred_region
      _
    $region25: #{tpu_custom_call.1} parent=1 // pred_fallthru
      _
    // Predicated region
    $region26: #{tpu_custom_call.1} parent=1 // pred_check
      _
    $region27: #{tpu_custom_call.1} parent=1 // pred_check_branch
      %30 = sbr.rel (0) target = $region29
    $region28: #{tpu_custom_call.1} parent=1 // pred_region
      _
    $region29: #{tpu_custom_call.1} parent=1 // pred_fallthru
      _
    // Predicated region
    $region30: #{tpu_custom_call.1} parent=1 // pred_check
      _
    $region31: #{tpu_custom_call.1} parent=1 // pred_check_branch
      %32 = sbr.rel (0) target = $region33
    $region32: #{tpu_custom_call.1} parent=1 // pred_region
      _
    $region33: #{tpu_custom_call.1} parent=1 // pred_fallthru
      _
    // Predicated region
    $region34: #{tpu_custom_call.1} parent=1 // pred_check
      _
    $region35: #{tpu_custom_call.1} parent=1 // pred_check_branch
      %34 = sbr.rel (0) target = $region37
    $region36: #{tpu_custom_call.1} parent=1 // pred_region
      _
    $region37: #{tpu_custom_call.1} parent=1 // pred_fallthru
      _
    %v35 = vld [vmem:[%s0] sm:$0xff]
    %v36 = vld [vmem:[%s0 + $0x8] sm:$0x1f]
    %v37 = vld [vmem:[%s1] sm:$0xff]
    %v38 = vld [vmem:[%s1 + $0x8] sm:$0xff]
    %v39 = vld [vmem:[%s1 + $0x10] sm:$0xff]
    %v40 = vld [vmem:[%s1 + $0x18] sm:$0x1]
    %v41 = vld [vmem:[%s2] sm:$0xff]
    %v42 = vld [vmem:[%s2 + $0x8] sm:$0xff]
    %v43 = vld [vmem:[%s2 + $0x10] sm:$0xff]
    %v44 = vld [vmem:[%s2 + $0x18] sm:$0x1]
    %46 = vset.pattern.permute.xlu0 0
    %47 = vperm.xlu0 %46, %v41
    %v48 = vpop.permute.xlu0 %47
    %51 = vset.pattern.permute.xlu0 0
    %52 = vperm.xlu0 %51, %v42
    %v53 = vpop.permute.xlu0 %52
    %56 = vset.pattern.permute.xlu0 0
    %57 = vperm.xlu0 %56, %v43
    %v58 = vpop.permute.xlu0 %57
    %61 = vset.pattern.permute.xlu0 0
    %62 = vperm.xlu0 %61, %v44
    %v63 = vpop.permute.xlu0 %62
    %vm65 = vcmask 105472
    %v67 = vsel %vm65, %v37, 0
    %v70 = vsel %vm65, %v38, 0
    %v73 = vsel %vm65, %v39, 0
    %v76 = vsel %vm65, %v40, 0
    %vm78 = vcmask 1044480
    %v80 = vsel %vm78, %v36, 0
    %82 = vmatprep.subr.mxu0 0.0
    %83 = vmatpush1.msra.mxu0 %v35
    %84 = vmatprep.subr.mxu0 0.0
    %85 = vmatpush1.msra.mxu0 %v80
    %86 = vmatprep.subr.mxu0 0.0
    %87 = vmatpush1.msra.mxu0 0.0
    %88 = vmatprep.subr.mxu0 0.0
    %89 = vmatpush1.msra.mxu0 0.0
    %90 = vmatprep.subr.mxu0 0.0
    %91 = vmatpush1.msra.mxu0 0.0
    %92 = vmatprep.subr.mxu0 0.0
    %93 = vmatpush1.msra.mxu0 0.0
    %94 = vmatprep.subr.mxu0 0.0
    %95 = vmatpush1.msra.mxu0 0.0
    %96 = vmatprep.subr.mxu0 0.0
    %97 = vmatpush1.msra.mxu0 0.0
    %98 = vmatprep.subr.mxu0 0.0
    %99 = vmatpush1.msra.mxu0 0.0
    %100 = vmatprep.subr.mxu0 0.0
    %101 = vmatpush1.msra.mxu0 0.0
    %102 = vmatprep.subr.mxu0 0.0
    %103 = vmatpush1.msra.mxu0 0.0
    %104 = vmatprep.subr.mxu0 0.0
    %105 = vmatpush1.msra.mxu0 0.0
    %106 = vmatprep.subr.mxu0 0.0
    %107 = vmatpush1.msra.mxu0 0.0
    %108 = vmatprep.subr.mxu0 0.0
    %109 = vmatpush1.msra.mxu0 0.0
    %110 = vmatprep.subr.mxu0 0.0
    %111 = vmatpush1.msra.mxu0 0.0
    %112 = vmatprep.subr.mxu0 0.0
    %113 = vmatpush1.msra.mxu0 0.0
    %114 = vmatprep.subr.mxu0 0.0
    %115 = vmatpush1.msra.mxu0 0.0
    %116 = vmatprep.subr.mxu0 0.0
    %117 = vmatpush1.msra.mxu0 0.0
    %118 = vmatprep.subr.mxu0 0.0
    %119 = vmatpush1.msra.mxu0 0.0
    %120 = vmatprep.subr.mxu0 0.0
    %121 = vmatpush1.msra.mxu0 0.0
    %122 = vmatprep.subr.mxu0 0.0
    %123 = vmatpush1.msra.mxu0 0.0
    %124 = vmatprep.subr.mxu0 0.0
    %125 = vmatpush1.msra.mxu0 0.0
    %126 = vmatprep.subr.mxu0 0.0
    %127 = vmatpush1.msra.mxu0 0.0
    %128 = vmatprep.subr.mxu0 0.0
    %129 = vmatpush1.msra.mxu0 0.0
    %130 = vmatprep.subr.mxu0 0.0
    %131 = vmatpush1.msra.mxu0 0.0
    %132 = vmatprep.subr.mxu0 0.0
    %133 = vmatpush1.msra.mxu0 0.0
    %134 = vmatprep.subr.mxu0 0.0
    %135 = vmatpush1.msra.mxu0 0.0
    %136 = vmatprep.subr.mxu0 0.0
    %137 = vmatpush1.msra.mxu0 0.0
    %138 = vmatprep.subr.mxu0 0.0
    %139 = vmatpush1.msra.mxu0 0.0
    %140 = vmatprep.subr.mxu0 0.0
    %141 = vmatpush1.msra.mxu0 0.0
    %142 = vmatprep.subr.mxu0 0.0
    %143 = vmatpush1.msra.mxu0 0.0
    %144 = vmatprep.subr.mxu0 0.0
    %145 = vmatpush1.msra.mxu0 0.0
    %146 = vmatprep.mubr.f32.mxu0 0.0
    %147 = vmatmul.mubr.f32.gmra.mrb[0].mxu0 %v67
    %v148 = vpop.f32.mrb[0].mxu0
    %v149 = vadd.f32 %v48, %v148
    %v150 = vpop.f32.mrb[0].mxu0
    %151 = vmatprep.mubr.f32.mxu0 0.0
    %152 = vmatmul.mubr.f32.gmra.mrb[0].mxu0 %v70
    %v153 = vpop.f32.mrb[0].mxu0
    %v154 = vadd.f32 %v53, %v153
    %v155 = vpop.f32.mrb[0].mxu0
    %156 = vmatprep.mubr.f32.mxu0 0.0
    %157 = vmatmul.mubr.f32.gmra.mrb[0].mxu0 %v73
    %v158 = vpop.f32.mrb[0].mxu0
    %v159 = vadd.f32 %v58, %v158
    %v160 = vpop.f32.mrb[0].mxu0
    %161 = vmatprep.mubr.f32.mxu0 0.0
    %162 = vmatmul.mubr.f32.gmra.mrb[0].mxu0 %v76
    %v163 = vpop.f32.mrb[0].mxu0
    %v164 = vadd.f32 %v63, %v163
    %v165 = vpop.f32.mrb[0].mxu0
    %166 = vdwg.mxu0
    %v167 = vmax.f32 %v149, 0.0
    %v168 = vmax.f32 %v154, 0.0
    %v169 = vmax.f32 %v159, 0.0
    %v170 = vmax.f32 %v164, 0.0
    %v171 = vld [vmem:[%s3] sm:$0xff]
    %v172 = vld [vmem:[%s3 + $0x8] sm:$0xf]
    %v173 = vld [vmem:[%s4] sm:$0xff]
    %v174 = vld [vmem:[%s4 + $0x8] sm:$0xf]
    %176 = vset.pattern.permute.xlu0 0
    %177 = vperm.xlu0 %176, %v173
    %v178 = vpop.permute.xlu0 %177
    %181 = vset.pattern.permute.xlu0 0
    %182 = vperm.xlu0 %181, %v174
    %v183 = vpop.permute.xlu0 %182
    %vm185 = vcmask 203776
    %v187 = vsel %vm185, %v171, 0
    %v190 = vsel %vm185, %v172, 0
    %vm192 = vcmask 1040384
    %v194 = vsel %vm192, %v170, 0
    %196 = vmatprep.subr.mxu0 0.0
    %197 = vmatpush1.msra.mxu0 %v167
    %198 = vmatprep.subr.mxu0 0.0
    %199 = vmatpush1.msra.mxu0 %v168
    %200 = vmatprep.subr.mxu0 0.0
    %201 = vmatpush1.msra.mxu0 %v169
    %202 = vmatprep.subr.mxu0 0.0
    %203 = vmatpush1.msra.mxu0 %v194
    %204 = vmatprep.subr.mxu0 0.0
    %205 = vmatpush1.msra.mxu0 0.0
    %206 = vmatprep.subr.mxu0 0.0
    %207 = vmatpush1.msra.mxu0 0.0
    %208 = vmatprep.subr.mxu0 0.0
    %209 = vmatpush1.msra.mxu0 0.0
    %210 = vmatprep.subr.mxu0 0.0
    %211 = vmatpush1.msra.mxu0 0.0
    %212 = vmatprep.subr.mxu0 0.0
    %213 = vmatpush1.msra.mxu0 0.0
    %214 = vmatprep.subr.mxu0 0.0
    %215 = vmatpush1.msra.mxu0 0.0
    %216 = vmatprep.subr.mxu0 0.0
    %217 = vmatpush1.msra.mxu0 0.0
    %218 = vmatprep.subr.mxu0 0.0
    %219 = vmatpush1.msra.mxu0 0.0
    %220 = vmatprep.subr.mxu0 0.0
    %221 = vmatpush1.msra.mxu0 0.0
    %222 = vmatprep.subr.mxu0 0.0
    %223 = vmatpush1.msra.mxu0 0.0
    %224 = vmatprep.subr.mxu0 0.0
    %225 = vmatpush1.msra.mxu0 0.0
    %226 = vmatprep.subr.mxu0 0.0
    %227 = vmatpush1.msra.mxu0 0.0
    %228 = vmatprep.subr.mxu0 0.0
    %229 = vmatpush1.msra.mxu0 0.0
    %230 = vmatprep.subr.mxu0 0.0
    %231 = vmatpush1.msra.mxu0 0.0
    %232 = vmatprep.subr.mxu0 0.0
    %233 = vmatpush1.msra.mxu0 0.0
    %234 = vmatprep.subr.mxu0 0.0
    %235 = vmatpush1.msra.mxu0 0.0
    %236 = vmatprep.subr.mxu0 0.0
    %237 = vmatpush1.msra.mxu0 0.0
    %238 = vmatprep.subr.mxu0 0.0
    %239 = vmatpush1.msra.mxu0 0.0
    %240 = vmatprep.subr.mxu0 0.0
    %241 = vmatpush1.msra.mxu0 0.0
    %242 = vmatprep.subr.mxu0 0.0
    %243 = vmatpush1.msra.mxu0 0.0
    %244 = vmatprep.subr.mxu0 0.0
    %245 = vmatpush1.msra.mxu0 0.0
    %246 = vmatprep.subr.mxu0 0.0
    %247 = vmatpush1.msra.mxu0 0.0
    %248 = vmatprep.subr.mxu0 0.0
    %249 = vmatpush1.msra.mxu0 0.0
    %250 = vmatprep.subr.mxu0 0.0
    %251 = vmatpush1.msra.mxu0 0.0
    %252 = vmatprep.subr.mxu0 0.0
    %253 = vmatpush1.msra.mxu0 0.0
    %254 = vmatprep.subr.mxu0 0.0
    %255 = vmatpush1.msra.mxu0 0.0
    %256 = vmatprep.subr.mxu0 0.0
    %257 = vmatpush1.msra.mxu0 0.0
    %258 = vmatprep.subr.mxu0 0.0
    %259 = vmatpush1.msra.mxu0 0.0
    %260 = vmatprep.mubr.f32.mxu0 0.0
    %261 = vmatmul.mubr.f32.gmra.mrb[0].mxu0 %v187
    %v262 = vpop.f32.mrb[0].mxu0
    %v263 = vadd.f32 %v178, %v262
    %v264 = vpop.f32.mrb[0].mxu0
    %265 = vmatprep.mubr.f32.mxu0 0.0
    %266 = vmatmul.mubr.f32.gmra.mrb[0].mxu0 %v190
    %v267 = vpop.f32.mrb[0].mxu0
    %v268 = vadd.f32 %v183, %v267
    %v269 = vpop.f32.mrb[0].mxu0
    %270 = vdwg.mxu0
    %v271 = vmax.f32 %v263, 0.0
    %v272 = vmax.f32 %v268, 0.0
    %v273 = vld [vmem:[%s5] sm:$0x3f]
    %v274 = vld [vmem:[%s6] sm:$0x3f]
    %276 = vset.pattern.permute.xlu0 0
    %277 = vperm.xlu0 %276, %v274
    %v278 = vpop.permute.xlu0 %277
    %vm280 = vcmask 97280
    %v282 = vsel %vm280, %v273, 0
    %vm284 = vcmask 1043456
    %v286 = vsel %vm284, %v272, 0
    %288 = vmatprep.subr.mxu0 0.0
    %289 = vmatpush1.msra.mxu0 %v271
    %290 = vmatprep.subr.mxu0 0.0
    %291 = vmatpush1.msra.mxu0 %v286
    %292 = vmatprep.subr.mxu0 0.0
    %293 = vmatpush1.msra.mxu0 0.0
    %294 = vmatprep.subr.mxu0 0.0
    %295 = vmatpush1.msra.mxu0 0.0
    %296 = vmatprep.subr.mxu0 0.0
    %297 = vmatpush1.msra.mxu0 0.0
    %298 = vmatprep.subr.mxu0 0.0
    %299 = vmatpush1.msra.mxu0 0.0
    %300 = vmatprep.subr.mxu0 0.0
    %301 = vmatpush1.msra.mxu0 0.0
    %302 = vmatprep.subr.mxu0 0.0
    %303 = vmatpush1.msra.mxu0 0.0
    %304 = vmatprep.subr.mxu0 0.0
    %305 = vmatpush1.msra.mxu0 0.0
    %306 = vmatprep.subr.mxu0 0.0
    %307 = vmatpush1.msra.mxu0 0.0
    %308 = vmatprep.subr.mxu0 0.0
    %309 = vmatpush1.msra.mxu0 0.0
    %310 = vmatprep.subr.mxu0 0.0
    %311 = vmatpush1.msra.mxu0 0.0
    %312 = vmatprep.subr.mxu0 0.0
    %313 = vmatpush1.msra.mxu0 0.0
    %314 = vmatprep.subr.mxu0 0.0
    %315 = vmatpush1.msra.mxu0 0.0
    %316 = vmatprep.subr.mxu0 0.0
    %317 = vmatpush1.msra.mxu0 0.0
    %318 = vmatprep.subr.mxu0 0.0
    %319 = vmatpush1.msra.mxu0 0.0
    %320 = vmatprep.subr.mxu0 0.0
    %321 = vmatpush1.msra.mxu0 0.0
    %322 = vmatprep.subr.mxu0 0.0
    %323 = vmatpush1.msra.mxu0 0.0
    %324 = vmatprep.subr.mxu0 0.0
    %325 = vmatpush1.msra.mxu0 0.0
    %326 = vmatprep.subr.mxu0 0.0
    %327 = vmatpush1.msra.mxu0 0.0
    %328 = vmatprep.subr.mxu0 0.0
    %329 = vmatpush1.msra.mxu0 0.0
    %330 = vmatprep.subr.mxu0 0.0
    %331 = vmatpush1.msra.mxu0 0.0
    %332 = vmatprep.subr.mxu0 0.0
    %333 = vmatpush1.msra.mxu0 0.0
    %334 = vmatprep.subr.mxu0 0.0
    %335 = vmatpush1.msra.mxu0 0.0
    %336 = vmatprep.subr.mxu0 0.0
    %337 = vmatpush1.msra.mxu0 0.0
    %338 = vmatprep.subr.mxu0 0.0
    %339 = vmatpush1.msra.mxu0 0.0
    %340 = vmatprep.subr.mxu0 0.0
    %341 = vmatpush1.msra.mxu0 0.0
    %342 = vmatprep.subr.mxu0 0.0
    %343 = vmatpush1.msra.mxu0 0.0
    %344 = vmatprep.subr.mxu0 0.0
    %345 = vmatpush1.msra.mxu0 0.0
    %346 = vmatprep.subr.mxu0 0.0
    %347 = vmatpush1.msra.mxu0 0.0
    %348 = vmatprep.subr.mxu0 0.0
    %349 = vmatpush1.msra.mxu0 0.0
    %350 = vmatprep.subr.mxu0 0.0
    %351 = vmatpush1.msra.mxu0 0.0
    %352 = vmatprep.mubr.f32.mxu0 0.0
    %353 = vmatmul.mubr.f32.gmra.mrb[0].mxu0 %v282
    %v354 = vpop.f32.mrb[0].mxu0
    %v355 = vadd.f32 %v278, %v354
    %v356 = vpop.f32.mrb[0].mxu0
    %357 = vdwg.mxu0
    %v358 = vmax.f32 %v355, 0.0
    %v359 = vld [vmem:[%s7] sm:$0x1]
    %v360 = vld [vmem:[#allocation2] sm:$0x1]
    %362 = vset.pattern.permute.xlu0 0
    %363 = vperm.xlu0 %362, %v360
    %v364 = vpop.permute.xlu0 %363
    %v366 = vlaneseq
    %v367 = vshrl.u32 %v366, 7
    %v368 = vsub.s32 0, %v367
    %v369 = vrot.slane %v364, %v368
    %vm370 = vcmask 48128
    %v372 = vsel %vm370, %v359, 0
    %vm374 = vcmask 1045504
    %v376 = vsel %vm374, %v358, 0
    %378 = vmatprep.subr.mxu0 0.0
    %379 = vmatpush1.msra.mxu0 %v376
    %380 = vmatprep.subr.mxu0 0.0
    %381 = vmatpush1.msra.mxu0 0.0
    %382 = vmatprep.subr.mxu0 0.0
    %383 = vmatpush1.msra.mxu0 0.0
    %384 = vmatprep.subr.mxu0 0.0
    %385 = vmatpush1.msra.mxu0 0.0
    %386 = vmatprep.subr.mxu0 0.0
    %387 = vmatpush1.msra.mxu0 0.0
    %388 = vmatprep.subr.mxu0 0.0
    %389 = vmatpush1.msra.mxu0 0.0
    %390 = vmatprep.subr.mxu0 0.0
    %391 = vmatpush1.msra.mxu0 0.0
    %392 = vmatprep.subr.mxu0 0.0
    %393 = vmatpush1.msra.mxu0 0.0
    %394 = vmatprep.subr.mxu0 0.0
    %395 = vmatpush1.msra.mxu0 0.0
    %396 = vmatprep.subr.mxu0 0.0
    %397 = vmatpush1.msra.mxu0 0.0
    %398 = vmatprep.subr.mxu0 0.0
    %399 = vmatpush1.msra.mxu0 0.0
    %400 = vmatprep.subr.mxu0 0.0
    %401 = vmatpush1.msra.mxu0 0.0
    %402 = vmatprep.subr.mxu0 0.0
    %403 = vmatpush1.msra.mxu0 0.0
    %404 = vmatprep.subr.mxu0 0.0
    %405 = vmatpush1.msra.mxu0 0.0
    %406 = vmatprep.subr.mxu0 0.0
    %407 = vmatpush1.msra.mxu0 0.0
    %408 = vmatprep.subr.mxu0 0.0
    %409 = vmatpush1.msra.mxu0 0.0
    %410 = vmatprep.subr.mxu0 0.0
    %411 = vmatpush1.msra.mxu0 0.0
    %412 = vmatprep.subr.mxu0 0.0
    %413 = vmatpush1.msra.mxu0 0.0
    %414 = vmatprep.subr.mxu0 0.0
    %415 = vmatpush1.msra.mxu0 0.0
    %416 = vmatprep.subr.mxu0 0.0
    %417 = vmatpush1.msra.mxu0 0.0
    %418 = vmatprep.subr.mxu0 0.0
    %419 = vmatpush1.msra.mxu0 0.0
    %420 = vmatprep.subr.mxu0 0.0
    %421 = vmatpush1.msra.mxu0 0.0
    %422 = vmatprep.subr.mxu0 0.0
    %423 = vmatpush1.msra.mxu0 0.0
    %424 = vmatprep.subr.mxu0 0.0
    %425 = vmatpush1.msra.mxu0 0.0
    %426 = vmatprep.subr.mxu0 0.0
    %427 = vmatpush1.msra.mxu0 0.0
    %428 = vmatprep.subr.mxu0 0.0
    %429 = vmatpush1.msra.mxu0 0.0
    %430 = vmatprep.subr.mxu0 0.0
    %431 = vmatpush1.msra.mxu0 0.0
    %432 = vmatprep.subr.mxu0 0.0
    %433 = vmatpush1.msra.mxu0 0.0
    %434 = vmatprep.subr.mxu0 0.0
    %435 = vmatpush1.msra.mxu0 0.0
    %436 = vmatprep.subr.mxu0 0.0
    %437 = vmatpush1.msra.mxu0 0.0
    %438 = vmatprep.subr.mxu0 0.0
    %439 = vmatpush1.msra.mxu0 0.0
    %440 = vmatprep.subr.mxu0 0.0
    %441 = vmatpush1.msra.mxu0 0.0
    %442 = vmatprep.mubr.f32.mxu0 0.0
    %443 = vmatmul.mubr.f32.gmra.mrb[0].mxu0 %v372
    %v444 = vpop.f32.mrb[0].mxu0
    %v445 = vadd.f32 %v369, %v444
    %v446 = vpop.f32.mrb[0].mxu0
    %447 = vdwg.mxu0
    %448 = vst [vmem:[#allocation3] sm:$0x1] %v445
    // Predicated region
    $region38: #{tpu_custom_call.1} parent=1 // pred_check
      _
    $region39: #{tpu_custom_call.1} parent=1 // pred_check_branch
      %450 = sbr.rel (0) target = $region41
    $region40: #{tpu_custom_call.1} parent=1 // pred_region
      %s452 = ssub.s32 16, 16
      %453 = vsyncadd [#allocation4], %s452
      %s455 = sshll.u32 [#allocation3], 4
      %s456 = int_to_ptr.vmem [resolvable:$true] %s455
      %458 = dma.vmem_to_hbm [thread:$0]  %s456, 16, %s9, [#allocation4]
    $region41: #{tpu_custom_call.1} parent=1 // pred_fallthru
      _
    // Predicated region
    $region42: #{tpu_custom_call.1} parent=1 // pred_check
      _
    $region43: #{tpu_custom_call.1} parent=1 // pred_check_branch
      %460 = sbr.rel (0) target = $region45
    $region44: #{tpu_custom_call.1} parent=1 // pred_region
      %461 = dma.done [#allocation4], 16
    $region45: #{tpu_custom_call.1} parent=1 // pred_fallthru
      _
    %462 = vsyncpa [#allocation4], 1

</llo_original>
